<compile_context>
chip_gen: v5e
topology: v5e:2x2
jax: 0.10.0
libtpu: 0.0.40
codegen_flags: <defaults>
</compile_context>

<pallas_src>
import functools

import jax
import jax.numpy as jnp
from jax.experimental import pallas as pl
from jax.experimental.pallas import tpu as pltpu


def _pmsnorm_kernel(x_ref, w_ref, o_ref, *, eps):
    # x_ref: (tile_rows, hidden), w_ref: (1, hidden) float32, o_ref: (tile_rows, hidden)
    x = x_ref[...].astype(jnp.float32)
    w = w_ref[...]                                          # already float32 (wrapper pre-cast)
    ms = jnp.mean(x * x, axis=-1, keepdims=True)            # (tile_rows, 1)
    inv = jax.lax.rsqrt(ms + eps)                           # (tile_rows, 1), EUP
    o_ref[...] = (x * inv * w).astype(o_ref.dtype)


def _device_kind():
    try:
        return jax.devices()[0].device_kind.lower()
    except Exception:
        return ""


def _vmem_capacity_bytes(kind):
    """Physical VMEM of the local chip; device_kind-dispatched fallback."""
    try:
        info = pltpu.get_tpu_info()
        cap = getattr(info, "vmem_capacity_bytes", None)
        if cap:
            return int(cap)
    except Exception:
        pass
    # Don't punish 128 MiB chips (v5e/v6e) with a v7x-sized fallback.
    if "v7" in kind:
        return 64 * 1024 * 1024
    return 128 * 1024 * 1024


def _num_tensorcores(kind):
    """TensorCores sharing the 'parallel' grid axis (v7x has 2 TCs/chip)."""
    return 2 if "v7" in kind else 1


def _round_up(x, m):
    return ((x + m - 1) // m) * m


def _select_tile_rows(rows, hidden, itemsize, vmem_cap, num_tc):
    """Pick a VMEM-budgeted, byte-targeted, sublane-aligned row-tile height."""
    # Sub-32-bit dtypes pack along sublanes: f32 -> 8, bf16 -> 16, int8/fp8 -> 32.
    sublane = max(8, 32 // itemsize)

    # Per-row VMEM cost per grid step:
    #   2x double-buffered input + 2x double-buffered output (native dtype)
    #   + ~2 f32-sized temps (f32 upcast of x + headroom for the scaled result
    #     before the down-cast store; the elementwise chain mostly fuses).
    bytes_per_row = hidden * (4 * itemsize + 2 * 4)
    budget = vmem_cap // 2                     # leave half of VMEM for the compiler
    tile = max(sublane, budget // max(bytes_per_row, 1))

    # Byte-targeted cap (replaces the old 2048-row cap): keep each x buffer
    # at <= ~16 MiB so small-hidden inputs still get multi-MiB tiles that
    # amortize the ~0.35 us fixed per-step cost, without absurd row counts.
    target_buf_bytes = 16 * 1024 * 1024
    byte_cap_rows = max(target_buf_bytes // max(hidden * itemsize, 1), sublane)
    tile = min(tile, byte_cap_rows)
    tile = max((tile // sublane) * sublane, sublane)

    # Keep >= 4 grid steps per TensorCore when rows allow (8 total on v7x),
    # so the sharded 'parallel' axis keeps both cores' DMA pipelines busy.
    min_steps = 4 * num_tc
    if rows >= min_steps * sublane:
        tile = min(tile, _round_up(pl.cdiv(rows, min_steps), sublane))
    else:
        tile = min(tile, _round_up(rows, sublane))
    return max(tile, sublane)


def pmsnorm(x, weight, eps=1e-5, tile_rows=None):
    """RMSNorm over the last axis of x, scaled by weight (shape = x.shape[-1])."""
    orig_shape = x.shape
    hidden = orig_shape[-1]
    assert weight.shape == (hidden,)

    x2d = x.reshape(-1, hidden)
    rows = x2d.shape[0]
    itemsize = jnp.dtype(x.dtype).itemsize

    kind = _device_kind()
    vmem_cap = _vmem_capacity_bytes(kind)
    num_tc = _num_tensorcores(kind)
    if tile_rows is None:
        tile_rows = _select_tile_rows(rows, hidden, itemsize, vmem_cap, num_tc)

    # Pre-cast once in the wrapper; the (1, hidden) block stays resident and
    # the kernel no longer re-casts it every grid step.
    w2d = weight.astype(jnp.float32).reshape(1, hidden)

    # No HBM-doubling jnp.pad: let Pallas mask the ragged last tile.
    grid = (pl.cdiv(rows, tile_rows),)

    # Raise the scoped-VMEM ceiling (defaults: 16 MiB v5e / 32 MiB v6e,v7x)
    # while leaving headroom below the physical capacity.
    vmem_limit = int(min(vmem_cap * 3 // 4, 120 * 1024 * 1024))

    # Memory-bound at ~1 flop/byte: advertise the HBM traffic to XLA.
    cost = pl.CostEstimate(
        flops=4 * rows * hidden,
        transcendentals=rows,
        bytes_accessed=2 * rows * hidden * itemsize + hidden * 4,
    )

    out = pl.pallas_call(
        functools.partial(_pmsnorm_kernel, eps=eps),
        out_shape=jax.ShapeDtypeStruct((rows, hidden), x.dtype),
        grid_spec=pltpu.PrefetchScalarGridSpec(
            num_scalar_prefetch=0,
            grid=grid,
            in_specs=[
                pl.BlockSpec((tile_rows, hidden), lambda i: (i, 0)),
                pl.BlockSpec((1, hidden), lambda i: (0, 0)),   # weight stays resident
            ],
            out_specs=pl.BlockSpec((tile_rows, hidden), lambda i: (i, 0)),
        ),
        compiler_params=pltpu.CompilerParams(
            # TODO(synk): verify in xprof that 'parallel' actually shards the
            # row grid across both v7x TensorCores; if not, switch to
            # pltpu.CORE_PARALLEL. No-op on single-TC v5e/v6e.
            dimension_semantics=("parallel",),
            vmem_limit_bytes=vmem_limit,
        ),
        cost_estimate=cost,
    )(x2d, w2d)

    return out.reshape(orig_shape)


if __name__ == "__main__":
    # Small shapes consistent with the module: (batch, seq, hidden)
    batch, seq, hidden = 2, 8, 32
    eps = 1e-5  # matches the PyTorch module default

    key = jax.random.PRNGKey(0)
    x = jax.random.normal(key, (batch, seq, hidden), dtype=jnp.float32)

    # Deterministic parameter init: nn.Parameter(torch.ones(hidden_size))
    weight = jnp.ones((hidden,), dtype=jnp.float32)

    out = pmsnorm(x, weight, eps=eps)
    out = jax.block_until_ready(out)

    # Pure-JAX reference check.
    ref = x * jax.lax.rsqrt(jnp.mean(x * x, axis=-1, keepdims=True) + eps) * weight
    assert out.shape == x.shape
    assert jnp.allclose(out, ref, atol=1e-5, rtol=1e-5), "mismatch vs reference"

    print("KERNEL_OK")
</pallas_src>

<mosaic_0001>
module attributes {stable_mosaic.version = 11 : i64} {
  func.func @_pmsnorm_kernel(%arg0: i32, %arg1: memref<16x32xf32, #tpu.memory_space<vmem>>, %arg2: memref<1x32xf32, #tpu.memory_space<vmem>>, %arg3: memref<16x32xf32, #tpu.memory_space<vmem>>) attributes {dimension_semantics = [#tpu.dimension_semantics<parallel>], iteration_bounds = array<i64: 1>, scalar_prefetch = 0 : i64, scratch_operands = 0 : i64, tpu.core_type = #tpu.core_type<tc>, window_params = [{transform_indices = @transform_0, window_bounds = array<i64: 16, 32>}, {pipeline_mode = #tpu.pipeline_mode<synchronous>, transform_indices = @transform_1, window_bounds = array<i64: 1, 32>}, {transform_indices = @transform_2, window_bounds = array<i64: 16, 32>}]} {
    %c0 = arith.constant 0 : index
    %c0_0 = arith.constant 0 : index
    %0 = vector.load %arg1[%c0, %c0_0] : memref<16x32xf32, #tpu.memory_space<vmem>>, vector<16x32xf32>
    %c0_1 = arith.constant 0 : index
    %c0_2 = arith.constant 0 : index
    %1 = vector.load %arg2[%c0_1, %c0_2] : memref<1x32xf32, #tpu.memory_space<vmem>>, vector<1x32xf32>
    %2 = arith.mulf %0, %0 : vector<16x32xf32>
    %cst = arith.constant dense<0.000000e+00> : vector<16xf32>
    %3 = vector.multi_reduction <add>, %2, %cst [1] : vector<16x32xf32> to vector<16xf32>
    %4 = vector.shape_cast %3 : vector<16xf32> to vector<16x1xf32>
    %cst_3 = arith.constant 3.200000e+01 : f32
    %5 = vector.broadcast %cst_3 : f32 to vector<16x1xf32>
    %6 = arith.divf %4, %5 : vector<16x1xf32>
    %cst_4 = arith.constant 9.99999974E-6 : f32
    %7 = vector.broadcast %cst_4 : f32 to vector<16x1xf32>
    %8 = arith.addf %6, %7 : vector<16x1xf32>
    %9 = math.rsqrt %8 : vector<16x1xf32>
    %10 = vector.broadcast %9 : vector<16x1xf32> to vector<16x32xf32>
    %11 = arith.mulf %0, %10 : vector<16x32xf32>
    %12 = vector.broadcast %1 : vector<1x32xf32> to vector<16x32xf32>
    %13 = arith.mulf %11, %12 : vector<16x32xf32>
    %c0_5 = arith.constant 0 : index
    %c0_6 = arith.constant 0 : index
    %14 = vector.load %arg3[%c0_5, %c0_6] : memref<16x32xf32, #tpu.memory_space<vmem>>, vector<16x32xf32>
    tpu.vector_store %arg3[%c0_5, %c0_6], %13 {strides = array<i32>} : memref<16x32xf32, #tpu.memory_space<vmem>>, vector<16x32xf32>,
    return
  }
  func.func @transform_0(%arg0: i32) -> (i32, i32) {
    %c0_i32 = arith.constant 0 : i32
    %c0_i32_0 = arith.constant 0 : i32
    return %arg0, %c0_i32 : i32, i32
  }
  func.func @transform_1(%arg0: i32) -> (i32, i32) {
    %c0_i32 = arith.constant 0 : i32
    %c0_i32_0 = arith.constant 0 : i32
    %c0_i32_1 = arith.constant 0 : i32
    return %c0_i32, %c0_i32_0 : i32, i32
  }
  func.func @transform_2(%arg0: i32) -> (i32, i32) {
    %c0_i32 = arith.constant 0 : i32
    %c0_i32_0 = arith.constant 0 : i32
    return %arg0, %c0_i32 : i32, i32
  }
}

</mosaic_0001>

<llo_original>
// kernel: tpu_custom_call.1
$region0: #{tpu_custom_call.1}
  #allocation0 [shape = 'u32[]', space=smem, size = 0x4, offset = 0x4, fixed_abs, tag = 'smem constant byte address 0x4 - core index']
  #allocation1 [shape = 'u32[72,128]{1,0:T(1,128)}', space=vmem, size = 0x9000, scoped, tag = 'internal scratch']
  %s0 = inlined_call_operand.hbm [shape: f32[16,32], index: 0, kind: input, shape index: {}]
  %s1 = inlined_call_operand.hbm [shape: f32[1,32], index: 1, kind: input, shape index: {}]
  %s2 = inlined_call_operand.hbm [shape: f32[16,32], index: 2, kind: output, shape index: {}]
  %s3 = sld [smem:[#allocation0]]
  $region26: #{tpu_custom_call.1} parent=0
    _
  %s5 = ssub.s32 1, %s3
  %s6 = scalar_select 0, %s5, %s3
  $region1: #{tpu_custom_call.1} parent=0
    #allocation2 [shape = 'u8[8192]{0}', space=vmem, size = 0x2000, scoped, tag = 'input window, operand 0, single buffered']
    #allocation3 [shape = 's32[1]{0}', space=sflag, size = 0x4, scoped, tag = 'scoped memory for tpu_custom_call.1']
    #allocation4 [shape = 's32[1]{0}', space=sflag, size = 0x4, scoped, tag = 'scoped memory for tpu_custom_call.1']
    #allocation5 [shape = 'u8[512]{0}', space=vmem, size = 0x400, scoped, tag = 'input window, operand 1, single buffered']
    #allocation6 [shape = 's32[1]{0}', space=sflag, size = 0x4, scoped, tag = 'scoped memory for tpu_custom_call.1']
    #allocation7 [shape = 'u8[8192]{0}', space=vmem, size = 0x2000, scoped, tag = 'output window, operand 0, single buffered']
    %7 = vsyncpa [#allocation3], 0
    %8 = vsyncpa [#allocation6], 0
    %9 = vsyncpa [#allocation4], 0
    // Predicated region
    $region2: #{tpu_custom_call.1} parent=1 // pred_check
      _
    $region3: #{tpu_custom_call.1} parent=1 // pred_check_branch
      %11 = sbr.rel (0) target = $region5
    $region4: #{tpu_custom_call.1} parent=1 // pred_region
      %13 = vsyncadd [#allocation3], 0
      %s14 = sshll.u32 %s0, 4
      %s15 = int_to_ptr.hbm [resolvable:$true] %s14
      %s16 = sshll.u32 [#allocation2], 4
      %s17 = int_to_ptr.vmem [resolvable:$true] %s16
      %22 = dma.hbm_to_vmem [thread:$0]  %s15, 256, %s17, [#allocation3], 128, 128, 8
    $region5: #{tpu_custom_call.1} parent=1 // pred_fallthru
      _
    // Predicated region
    $region6: #{tpu_custom_call.1} parent=1 // pred_check
      _
    $region7: #{tpu_custom_call.1} parent=1 // pred_check_branch
      %24 = sbr.rel (0) target = $region9
    $region8: #{tpu_custom_call.1} parent=1 // pred_region
      %26 = vsyncadd [#allocation6], 0
      %s28 = sshll.u32 %s1, 4
      %s29 = int_to_ptr.hbm [resolvable:$true] %s28
      %s30 = sshll.u32 [#allocation5], 4
      %s31 = int_to_ptr.vmem [resolvable:$true] %s30
      %33 = dma.hbm_to_vmem [thread:$0]  %s29, 16, %s31, [#allocation6]
    $region9: #{tpu_custom_call.1} parent=1 // pred_fallthru
      _
    // Predicated region
    $region10: #{tpu_custom_call.1} parent=1 // pred_check
      _
    $region11: #{tpu_custom_call.1} parent=1 // pred_check_branch
      %35 = sbr.rel (0) target = $region13
    $region12: #{tpu_custom_call.1} parent=1 // pred_region
      %37 = dma.done [#allocation3], 256
    $region13: #{tpu_custom_call.1} parent=1 // pred_fallthru
      _
    // Predicated region
    $region14: #{tpu_custom_call.1} parent=1 // pred_check
      _
    $region15: #{tpu_custom_call.1} parent=1 // pred_check_branch
      %39 = sbr.rel (0) target = $region17
    $region16: #{tpu_custom_call.1} parent=1 // pred_region
      %41 = dma.done [#allocation6], 16
    $region17: #{tpu_custom_call.1} parent=1 // pred_fallthru
      _
    %v42 = vld [vmem:[#allocation2] sm:$0xff]
    %v43 = vld [vmem:[#allocation2 + $0x8] sm:$0xff]
    %v44 = vld [vmem:[#allocation5] sm:$0x1]
    %v45 = vmul.f32 %v42, %v42
    %v46 = vmul.f32 %v43, %v43
    %vm47 = vcmask 261120
    %v48 = vsel %vm47, %v45, 0.0
    %49 = vadd.xlane.f32.xlu0 %v48
    %v50 = vpop.xlane.xlu0 %49
    %v51 = vsel %vm47, %v46, 0.0
    %52 = vadd.xlane.f32.xlu0 %v51
    %v53 = vpop.xlane.xlu0 %52
    %v54 = vrcp.pop 32.0
    %v55 = vmul.f32 32.0, %v54
    %v56 = vsub.f32 1.0, %v55
    %v57 = vmul.f32 %v54, %v56
    %v58 = vadd.f32 %v54, %v57
    %vm59 = vweird.f32 %v54
    %v60 = vsel %vm59, %v54, %v58
    %v61 = vmul.f32 %v50, %v60
    %v62 = vmul.f32 %v53, %v60
    %v63 = vadd.f32 %v61, 1e-05
    %v64 = vadd.f32 %v62, 1e-05
    %v65 = vrsqrt.pop %v63
    %v66 = vmul.f32 %v65, %v63
    %v67 = vmul.f32 %v66, %v65
    %v68 = vmul.f32 0.5, %v67
    %v69 = vsub.f32 1.5, %v68
    %v70 = vmul.f32 %v65, %v69
    %vm71 = vweird.f32 %v63
    %vm72 = vweird.f32 %v65
    %vm73 = vmor %vm71, %vm72
    %v74 = vsel %vm73, %v65, %v70
    %v75 = vrsqrt.pop %v64
    %v76 = vmul.f32 %v75, %v64
    %v77 = vmul.f32 %v76, %v75
    %v78 = vmul.f32 0.5, %v77
    %v79 = vsub.f32 1.5, %v78
    %v80 = vmul.f32 %v75, %v79
    %vm81 = vweird.f32 %v64
    %vm82 = vweird.f32 %v75
    %vm83 = vmor %vm81, %vm82
    %v84 = vsel %vm83, %v75, %v80
    %v85 = vmul.f32 %v42, %v74
    %v86 = vmul.f32 %v43, %v84
    %v88 = vperm.slane %v44, 0
    %v90 = vmul.f32 %v85, %v88
    %v91 = vmul.f32 %v86, %v88
    %92 = vst.msk [vmem:[#allocation7] sm:$0xff] %vm47, %v90
    %93 = vst.msk [vmem:[#allocation7 + $0x8] sm:$0xff] %vm47, %v91
    // Predicated region
    $region18: #{tpu_custom_call.1} parent=1 // pred_check
      _
    $region19: #{tpu_custom_call.1} parent=1 // pred_check_branch
      %95 = sbr.rel (0) target = $region21
    $region20: #{tpu_custom_call.1} parent=1 // pred_region
      %97 = vsyncadd [#allocation4], 0
      %s98 = sshll.u32 [#allocation7], 4
      %s99 = int_to_ptr.vmem [resolvable:$true] %s98
      %s100 = sshll.u32 %s2, 4
      %s101 = int_to_ptr.hbm [resolvable:$true] %s100
      %106 = dma.vmem_to_hbm [thread:$0]  %s99, 256, %s101, [#allocation4], 128, 128, 8
    $region21: #{tpu_custom_call.1} parent=1 // pred_fallthru
      _
    // Predicated region
    $region22: #{tpu_custom_call.1} parent=1 // pred_check
      _
    $region23: #{tpu_custom_call.1} parent=1 // pred_check_branch
      %108 = sbr.rel (0) target = $region25
    $region24: #{tpu_custom_call.1} parent=1 // pred_region
      %110 = dma.done [#allocation4], 256
    $region25: #{tpu_custom_call.1} parent=1 // pred_fallthru
      _
    %111 = vsyncpa [#allocation3], 1
    %112 = vsyncpa [#allocation6], 1
    %113 = vsyncpa [#allocation4], 1

</llo_original>
